<compile_context>
chip_gen: v6e
topology: v6e:2x2x1
jax: 0.10.0
libtpu: 0.0.40
codegen_flags: <defaults>
</compile_context>

<pallas_src>
import math

import jax
import jax.numpy as jnp
from jax.experimental import pallas as pl
from jax.experimental.pallas import tpu as pltpu


def ia_gate_kernel(gate_ref, x_ref, o_ref):
    """One grid step: one (row-tile, spatial-tile) block.

    gate_ref : (tR, 1)    per-(batch, channel) gate for these rows
    x_ref    : (tR, tHW)  feature rows, spatial on lanes
    o_ref    : (tR, tHW)  gated output
    """
    o_ref[...] = (x_ref[...] * gate_ref[...]).astype(o_ref.dtype)


def _largest_divisor_multiple(dim, quantum, cap):
    """Largest t with t % quantum == 0, dim % t == 0, t <= min(dim, cap)."""
    best = quantum
    limit = min(dim, max(quantum, cap))
    t = quantum
    while t <= limit:
        if dim % t == 0:
            best = t
        t += quantum
    return best


def _choose_tiles(rows, hw, itemsize, target_bytes=2 * 1024 * 1024):
    """Pick (tR, tHW): lane-dense, sublane-aligned tiles within ~target_bytes each."""
    if hw % 128 == 0:
        max_thw = max(128, (target_bytes // (8 * itemsize)) // 128 * 128)
        t_hw = _largest_divisor_multiple(hw, 128, max_thw)
    else:
        # Full-extent block along the last dim keeps the BlockSpec legal for odd sizes.
        t_hw = hw
    if rows % 8 == 0:
        max_tr = max(8, (target_bytes // max(t_hw * itemsize, 1)) // 8 * 8)
        t_r = _largest_divisor_multiple(rows, 8, max_tr)
    else:
        t_r = rows
    return t_r, t_hw


def ia_gate(x, ia_head, weight, bias):
    """x: (N, C, H, W); ia_head: (N, in_dim); weight: (C, in_dim); bias: (C,)."""
    N, C, H, W = x.shape
    HW = H * W
    R = N * C

    # Free reshapes — no transpose, no extra HBM pass.
    x_flat = x.reshape(R, HW)

    # Hoisted gate: tiny matmul + tanh done once by XLA in f32, then cast to x's dtype.
    gate = 1.0 + jnp.tanh(
        jnp.dot(ia_head.astype(jnp.float32), weight.T.astype(jnp.float32))
        + bias.astype(jnp.float32)
    )
    gate = gate.astype(x.dtype).reshape(R, 1)

    tR, tHW = _choose_tiles(R, HW, jnp.dtype(x.dtype).itemsize)
    grid = (pl.cdiv(R, tR), pl.cdiv(HW, tHW))

    out = pl.pallas_call(
        ia_gate_kernel,
        out_shape=jax.ShapeDtypeStruct((R, HW), x.dtype),
        grid_spec=pltpu.PrefetchScalarGridSpec(
            num_scalar_prefetch=0,
            grid=grid,
            in_specs=[
                # Gate block index is constant along the inner spatial axis -> no re-DMA.
                pl.BlockSpec((tR, 1), lambda r, h: (r, 0)),
                pl.BlockSpec((tR, tHW), lambda r, h: (r, h)),
            ],
            out_specs=pl.BlockSpec((tR, tHW), lambda r, h: (r, h)),
        ),
        compiler_params=pltpu.CompilerParams(
            dimension_semantics=("parallel", "parallel"),
        ),
    )(gate, x_flat)

    return out.reshape(N, C, H, W)


def ia_gate_reference(x, ia_head, weight, bias):
    a = ia_head @ weight.T + bias                # (N, C)
    a = 1.0 + jnp.tanh(a)
    return a[:, :, None, None] * x


if __name__ == "__main__":
    # Small shapes consistent with the module: x (N, C, H, W), IA_head (N, in_dim),
    # Linear(in_dim -> out_dim=C).
    N, C, H, W = 2, 8, 16, 16
    in_dim = 16

    key = jax.random.PRNGKey(0)
    kx, kh, kw, kb = jax.random.split(key, 4)

    x = jax.random.normal(kx, (N, C, H, W), dtype=jnp.float32)
    ia_head = jax.random.normal(kh, (N, in_dim), dtype=jnp.float32)

    # Deterministic params matching nn.Linear's uniform(-1/sqrt(in), 1/sqrt(in)) init.
    bound = 1.0 / math.sqrt(in_dim)
    weight = jax.random.uniform(kw, (C, in_dim), minval=-bound, maxval=bound,
                                dtype=jnp.float32)
    bias = jax.random.uniform(kb, (C,), minval=-bound, maxval=bound, dtype=jnp.float32)

    out = jax.block_until_ready(ia_gate(x, ia_head, weight, bias))
    ref = ia_gate_reference(x, ia_head, weight, bias)

    assert out.shape == x.shape and out.dtype == x.dtype
    assert jnp.allclose(out, ref, atol=1e-5, rtol=1e-5), "mismatch vs reference"
    print("KERNEL_OK")
</pallas_src>

<mosaic_0001>
module attributes {stable_mosaic.version = 11 : i64} {
  func.func @ia_gate_kernel(%arg0: i32, %arg1: i32, %arg2: memref<16x1xf32, #tpu.memory_space<vmem>>, %arg3: memref<16x256xf32, #tpu.memory_space<vmem>>, %arg4: memref<16x256xf32, #tpu.memory_space<vmem>>) attributes {dimension_semantics = [#tpu.dimension_semantics<parallel>, #tpu.dimension_semantics<parallel>], iteration_bounds = array<i64: 1, 1>, scalar_prefetch = 0 : i64, scratch_operands = 0 : i64, tpu.core_type = #tpu.core_type<tc>, window_params = [{transform_indices = @transform_0, window_bounds = array<i64: 16, 1>}, {transform_indices = @transform_1, window_bounds = array<i64: 16, 256>}, {transform_indices = @transform_2, window_bounds = array<i64: 16, 256>}]} {
    %c0 = arith.constant 0 : index
    %c0_0 = arith.constant 0 : index
    %0 = vector.load %arg3[%c0, %c0_0] : memref<16x256xf32, #tpu.memory_space<vmem>>, vector<16x256xf32>
    %c0_1 = arith.constant 0 : index
    %c0_2 = arith.constant 0 : index
    %1 = vector.load %arg2[%c0_1, %c0_2] : memref<16x1xf32, #tpu.memory_space<vmem>>, vector<16x1xf32>
    %2 = vector.broadcast %1 : vector<16x1xf32> to vector<16x256xf32>
    %3 = arith.mulf %0, %2 : vector<16x256xf32>
    %c0_3 = arith.constant 0 : index
    %c0_4 = arith.constant 0 : index
    %4 = vector.load %arg4[%c0_3, %c0_4] : memref<16x256xf32, #tpu.memory_space<vmem>>, vector<16x256xf32>
    tpu.vector_store %arg4[%c0_3, %c0_4], %3 {strides = array<i32>} : memref<16x256xf32, #tpu.memory_space<vmem>>, vector<16x256xf32>,
    return
  }
  func.func @transform_0(%arg0: i32, %arg1: i32) -> (i32, i32) {
    %c0_i32 = arith.constant 0 : i32
    %c0_i32_0 = arith.constant 0 : i32
    return %arg0, %c0_i32 : i32, i32
  }
  func.func @transform_1(%arg0: i32, %arg1: i32) -> (i32, i32) {
    %c0_i32 = arith.constant 0 : i32
    return %arg0, %arg1 : i32, i32
  }
  func.func @transform_2(%arg0: i32, %arg1: i32) -> (i32, i32) {
    %c0_i32 = arith.constant 0 : i32
    return %arg0, %arg1 : i32, i32
  }
}

</mosaic_0001>

<llo_original>
// kernel: tpu_custom_call.1
$region0: #{tpu_custom_call.1}
  #allocation0 [shape = 'u32[]', space=smem, size = 0x4, offset = 0x4, fixed_abs, tag = 'smem constant byte address 0x4 - core index']
  #allocation1 [shape = 'u32[144,128]{1,0:T(1,128)}', space=vmem, size = 0x12000, scoped, tag = 'internal scratch']
  %s0 = inlined_call_operand.vmem [shape: f32[16,1], index: 0, kind: input, shape index: {}]
  %s1 = inlined_call_operand.hbm [shape: f32[16,256], index: 1, kind: input, shape index: {}]
  %s2 = inlined_call_operand.hbm [shape: f32[16,256], index: 2, kind: output, shape index: {}]
  %s3 = sld [smem:[#allocation0]]
  $region22: #{tpu_custom_call.1} parent=0
    _
  %s5 = ssub.s32 1, %s3
  %s6 = scalar_select 0, %s5, %s3
  $region1: #{tpu_custom_call.1} parent=0
    #allocation2 [shape = 'u8[16384]{0}', space=vmem, size = 0x4000, scoped, tag = 'input window, operand 1, single buffered']
    #allocation3 [shape = 's32[1]{0}', space=sflag, size = 0x4, scoped, tag = 'scoped memory for tpu_custom_call.1']
    #allocation4 [shape = 's32[1]{0}', space=sflag, size = 0x4, scoped, tag = 'scoped memory for tpu_custom_call.1']
    #allocation5 [shape = 'u8[16384]{0}', space=vmem, size = 0x4000, scoped, tag = 'output window, operand 0, single buffered']
    %7 = vsyncpa [#allocation3], 0
    %8 = vsyncpa [#allocation4], 0
    // Predicated region
    $region2: #{tpu_custom_call.1} parent=1 // pred_check
      _
    $region3: #{tpu_custom_call.1} parent=1 // pred_check_branch
      %10 = sbr.rel (0) target = $region5
    $region4: #{tpu_custom_call.1} parent=1 // pred_region
      _
    $region5: #{tpu_custom_call.1} parent=1 // pred_fallthru
      _
    // Predicated region
    $region6: #{tpu_custom_call.1} parent=1 // pred_check
      _
    $region7: #{tpu_custom_call.1} parent=1 // pred_check_branch
      %12 = sbr.rel (0) target = $region9
    $region8: #{tpu_custom_call.1} parent=1 // pred_region
      %s14 = ssub.s32 512, 512
      %15 = vsyncadd [#allocation3], %s14
      %s16 = sshll.u32 [#allocation2], 4
      %s17 = int_to_ptr.vmem [resolvable:$true] %s16
      %22 = dma.hbm_to_vmem [thread:$0]  %s1, 512, %s17, [#allocation3], 256, 256, 16
    $region9: #{tpu_custom_call.1} parent=1 // pred_fallthru
      _
    // Predicated region
    $region10: #{tpu_custom_call.1} parent=1 // pred_check
      _
    $region11: #{tpu_custom_call.1} parent=1 // pred_check_branch
      %24 = sbr.rel (0) target = $region13
    $region12: #{tpu_custom_call.1} parent=1 // pred_region
      %25 = dma.done [#allocation3], 512
    $region13: #{tpu_custom_call.1} parent=1 // pred_fallthru
      _
    %v26 = vld [vmem:[#allocation2] sm:$0xff]
    %v27 = vld [vmem:[#allocation2 + $0x8] sm:$0xff]
    %v28 = vld [vmem:[#allocation2 + $0x10] sm:$0xff]
    %v29 = vld [vmem:[#allocation2 + $0x18] sm:$0xff]
    %v30 = vld [vmem:[%s0] sm:$0xff]
    %v31 = vld [vmem:[%s0 + $0x8] sm:$0xff]
    %33 = vset.pattern.permute.xlu0 0
    %34 = vperm.xlu0 %33, %v30
    %v35 = vpop.permute.xlu0 %34
    %38 = vset.pattern.permute.xlu0 0
    %39 = vperm.xlu0 %38, %v31
    %v40 = vpop.permute.xlu0 %39
    %v42 = vmul.f32 %v26, %v35
    %v43 = vmul.f32 %v27, %v35
    %v44 = vmul.f32 %v28, %v40
    %v45 = vmul.f32 %v29, %v40
    %46 = vst [vmem:[#allocation5] sm:$0xff] %v42
    %47 = vst [vmem:[#allocation5 + $0x8] sm:$0xff] %v43
    %48 = vst [vmem:[#allocation5 + $0x10] sm:$0xff] %v44
    %49 = vst [vmem:[#allocation5 + $0x18] sm:$0xff] %v45
    // Predicated region
    $region14: #{tpu_custom_call.1} parent=1 // pred_check
      _
    $region15: #{tpu_custom_call.1} parent=1 // pred_check_branch
      %51 = sbr.rel (0) target = $region17
    $region16: #{tpu_custom_call.1} parent=1 // pred_region
      %s53 = ssub.s32 512, 512
      %54 = vsyncadd [#allocation4], %s53
      %s55 = sshll.u32 [#allocation5], 4
      %s56 = int_to_ptr.vmem [resolvable:$true] %s55
      %61 = dma.vmem_to_hbm [thread:$0]  %s56, 512, %s2, [#allocation4], 256, 256, 16
    $region17: #{tpu_custom_call.1} parent=1 // pred_fallthru
      _
    // Predicated region
    $region18: #{tpu_custom_call.1} parent=1 // pred_check
      _
    $region19: #{tpu_custom_call.1} parent=1 // pred_check_branch
      %63 = sbr.rel (0) target = $region21
    $region20: #{tpu_custom_call.1} parent=1 // pred_region
      %64 = dma.done [#allocation4], 512
    $region21: #{tpu_custom_call.1} parent=1 // pred_fallthru
      _
    %65 = vsyncpa [#allocation3], 1
    %66 = vsyncpa [#allocation4], 1

</llo_original>
